<compile_context>
chip_gen: v7x
topology: tpu7x:2x2x1
jax: 0.10.0
libtpu: 0.0.40
codegen_flags: <defaults>
</compile_context>

<pallas_src>
import jax
import jax.numpy as jnp
from jax.experimental import pallas as pl
from jax.experimental.pallas import tpu as pltpu


def _round_up(n, m):
    return ((n + m - 1) // m) * m


def mlp_kernel(x_ref, w0_ref, b0_ref, w1_ref, b1_ref, w2_ref, b2_ref, out_ref):
    x = x_ref[...]                                                  # (TB, 4) f32

    # fc0 + ReLU
    h0 = jnp.dot(x, w0_ref[...], preferred_element_type=jnp.float32)
    h0 = jnp.maximum(h0 + b0_ref[...], 0.0)

    # fc1 + ReLU
    h1 = jnp.dot(h0, w1_ref[...], preferred_element_type=jnp.float32)
    h1 = jnp.maximum(h1 + b1_ref[...], 0.0)

    # fc2 (no activation); stored at the true n_out width (no lane padding in HBM)
    h2 = jnp.dot(h1, w2_ref[...], preferred_element_type=jnp.float32)
    out_ref[...] = (h2 + b2_ref[...]).astype(out_ref.dtype)


def linear_model_forward(x, params, *, block_b=4096, out_dtype=jnp.float32):
    """Fused MLP forward.

    x: (B, ...) -- flattened to (B, 4) like torch.nn.Flatten().
    params: dict with w0 (4,8), b0 (8,) or (1,8), w1 (8,16), b1 (16,) or (1,16),
            w2 (16,n_out), b2 (n_out,) or (1,n_out).
    Returns (B, n_out) in out_dtype (default float32).
    """
    w0 = params["w0"].astype(jnp.float32)
    w1 = params["w1"].astype(jnp.float32)
    w2 = params["w2"].astype(jnp.float32)
    b0 = params["b0"].reshape(1, -1).astype(jnp.float32)
    b1 = params["b1"].reshape(1, -1).astype(jnp.float32)
    b2 = params["b2"].reshape(1, -1).astype(jnp.float32)

    B = x.shape[0]
    x = x.reshape(B, -1).astype(jnp.float32)                 # Flatten()
    d_in = x.shape[1]
    assert d_in == w0.shape[0], "flattened feature dim must match fc0 in_features"
    n_out = w2.shape[1]

    # Batch: pad only to a multiple of 8 sublanes (tiny / usually a no-op).
    B_p = _round_up(B, 8)
    if B_p != B:
        x = jnp.pad(x, ((0, B_p - B), (0, 0)))

    # Batch tile: big to amortize per-grid-step overhead; ~16 MiB total VMEM at
    # TB=4096 (double-buffered x/out tiles + temporaries), within the 32 MiB limit.
    TB = min(_round_up(block_b, 8), B_p)
    grid = (pl.cdiv(B_p, TB),)

    # Weights/biases: full-array blocks pinned at block (0, 0) -> VMEM-resident.
    def resident(arr):
        return pl.BlockSpec(arr.shape, lambda i: (0, 0))

    flops = 2 * B_p * (d_in * 8 + 8 * 16 + 16 * n_out)
    bytes_accessed = 4 * (
        B_p * (d_in + n_out)
        + w0.size + b0.size + w1.size + b1.size + w2.size + b2.size
    )

    out = pl.pallas_call(
        mlp_kernel,
        out_shape=jax.ShapeDtypeStruct((B_p, n_out), out_dtype),
        grid=grid,
        in_specs=[
            pl.BlockSpec((TB, d_in), lambda i: (i, 0)),      # x, batch-tiled
            resident(w0), resident(b0),
            resident(w1), resident(b1),
            resident(w2), resident(b2),
        ],
        out_specs=pl.BlockSpec((TB, n_out), lambda i: (i, 0)),
        compiler_params=pltpu.CompilerParams(
            # Batch axis is embarrassingly parallel; on v7x switch to
            # pltpu.CORE_PARALLEL if a trace shows single-TC execution.
            dimension_semantics=("parallel",),
            vmem_limit_bytes=32 * 1024 * 1024,
        ),
        cost_estimate=pl.CostEstimate(
            flops=flops, transcendentals=0, bytes_accessed=bytes_accessed),
    )(x, w0, b0, w1, b1, w2, b2)

    if B_p != B:
        out = out[:B]
    return out


def init_params(key, n_output):
    """PyTorch-style uniform init; weights stored (in_features, out_features),
    biases stored 1-D like a PyTorch export."""
    dims = [(4, 8), (8, 16), (16, n_output)]
    params = {}
    for i, (fan_in, fan_out) in enumerate(dims):
        key, kw, kb = jax.random.split(key, 3)
        bound = 1.0 / jnp.sqrt(fan_in)
        params[f"w{i}"] = jax.random.uniform(
            kw, (fan_in, fan_out), jnp.float32, -bound, bound)
        params[f"b{i}"] = jax.random.uniform(
            kb, (fan_out,), jnp.float32, -bound, bound)
    return params


def reference_forward(x, params):
    x = x.reshape(x.shape[0], -1)
    h = jnp.maximum(x @ params["w0"] + params["b0"], 0.0)
    h = jnp.maximum(h @ params["w1"] + params["b1"], 0.0)
    return h @ params["w2"] + params["b2"]


if __name__ == "__main__":
    key = jax.random.PRNGKey(0)
    key, kx = jax.random.split(key)

    n_output = 10
    batch = 8
    # (B, 2, 2) input -> Flatten() -> (B, 4), exactly as the PyTorch module.
    x = jax.random.normal(kx, (batch, 2, 2), jnp.float32)

    params = init_params(key, n_output)

    out = linear_model_forward(x, params)
    out = jax.block_until_ready(out)

    ref = reference_forward(x, params)
    assert out.shape == (batch, n_output)
    assert jnp.allclose(out, ref, atol=1e-5, rtol=1e-5), "mismatch vs reference"

    print("KERNEL_OK")
</pallas_src>

<mosaic_0001>
module attributes {stable_mosaic.version = 11 : i64} {
  func.func @mlp_kernel(%arg0: i32, %arg1: memref<8x4xf32, #tpu.memory_space<vmem>>, %arg2: memref<4x8xf32, #tpu.memory_space<vmem>>, %arg3: memref<1x8xf32, #tpu.memory_space<vmem>>, %arg4: memref<8x16xf32, #tpu.memory_space<vmem>>, %arg5: memref<1x16xf32, #tpu.memory_space<vmem>>, %arg6: memref<16x10xf32, #tpu.memory_space<vmem>>, %arg7: memref<1x10xf32, #tpu.memory_space<vmem>>, %arg8: memref<8x10xf32, #tpu.memory_space<vmem>>) attributes {dimension_semantics = [#tpu.dimension_semantics<parallel>], iteration_bounds = array<i64: 1>, scalar_prefetch = 0 : i64, scratch_operands = 0 : i64, tpu.core_type = #tpu.core_type<tc>, window_params = [{transform_indices = @transform_0, window_bounds = array<i64: 8, 4>}, {pipeline_mode = #tpu.pipeline_mode<synchronous>, transform_indices = @transform_1, window_bounds = array<i64: 4, 8>}, {pipeline_mode = #tpu.pipeline_mode<synchronous>, transform_indices = @transform_2, window_bounds = array<i64: 1, 8>}, {pipeline_mode = #tpu.pipeline_mode<synchronous>, transform_indices = @transform_3, window_bounds = array<i64: 8, 16>}, {pipeline_mode = #tpu.pipeline_mode<synchronous>, transform_indices = @transform_4, window_bounds = array<i64: 1, 16>}, {pipeline_mode = #tpu.pipeline_mode<synchronous>, transform_indices = @transform_5, window_bounds = array<i64: 16, 10>}, {pipeline_mode = #tpu.pipeline_mode<synchronous>, transform_indices = @transform_6, window_bounds = array<i64: 1, 10>}, {transform_indices = @transform_7, window_bounds = array<i64: 8, 10>}]} {
    %c0 = arith.constant 0 : index
    %c0_0 = arith.constant 0 : index
    %0 = vector.load %arg1[%c0, %c0_0] : memref<8x4xf32, #tpu.memory_space<vmem>>, vector<8x4xf32>
    %c0_1 = arith.constant 0 : index
    %c0_2 = arith.constant 0 : index
    %1 = vector.load %arg2[%c0_1, %c0_2] : memref<4x8xf32, #tpu.memory_space<vmem>>, vector<4x8xf32>
    %cst = arith.constant dense<0.000000e+00> : vector<8x8xf32>
    %2 = tpu.matmul %0, %1, %cst {dimension_numbers = #tpu.dot_dimension_numbers<[1], [0], [0], [1], [0, 0, 1, 1], [], []>} : vector<8x4xf32>, vector<4x8xf32>, vector<8x8xf32> -> vector<8x8xf32>
    %c0_3 = arith.constant 0 : index
    %c0_4 = arith.constant 0 : index
    %3 = vector.load %arg3[%c0_3, %c0_4] : memref<1x8xf32, #tpu.memory_space<vmem>>, vector<1x8xf32>
    %4 = vector.broadcast %3 : vector<1x8xf32> to vector<8x8xf32>
    %5 = arith.addf %2, %4 : vector<8x8xf32>
    %cst_5 = arith.constant 0.000000e+00 : f32
    %6 = vector.broadcast %cst_5 : f32 to vector<8x8xf32>
    %7 = arith.maximumf %5, %6 : vector<8x8xf32>
    %c0_6 = arith.constant 0 : index
    %c0_7 = arith.constant 0 : index
    %8 = vector.load %arg4[%c0_6, %c0_7] : memref<8x16xf32, #tpu.memory_space<vmem>>, vector<8x16xf32>
    %cst_8 = arith.constant dense<0.000000e+00> : vector<8x16xf32>
    %9 = tpu.matmul %7, %8, %cst_8 {dimension_numbers = #tpu.dot_dimension_numbers<[1], [0], [0], [1], [0, 0, 1, 1], [], []>} : vector<8x8xf32>, vector<8x16xf32>, vector<8x16xf32> -> vector<8x16xf32>
    %c0_9 = arith.constant 0 : index
    %c0_10 = arith.constant 0 : index
    %10 = vector.load %arg5[%c0_9, %c0_10] : memref<1x16xf32, #tpu.memory_space<vmem>>, vector<1x16xf32>
    %11 = vector.broadcast %10 : vector<1x16xf32> to vector<8x16xf32>
    %12 = arith.addf %9, %11 : vector<8x16xf32>
    %cst_11 = arith.constant 0.000000e+00 : f32
    %13 = vector.broadcast %cst_11 : f32 to vector<8x16xf32>
    %14 = arith.maximumf %12, %13 : vector<8x16xf32>
    %c0_12 = arith.constant 0 : index
    %c0_13 = arith.constant 0 : index
    %15 = vector.load %arg6[%c0_12, %c0_13] : memref<16x10xf32, #tpu.memory_space<vmem>>, vector<16x10xf32>
    %cst_14 = arith.constant dense<0.000000e+00> : vector<8x10xf32>
    %16 = tpu.matmul %14, %15, %cst_14 {dimension_numbers = #tpu.dot_dimension_numbers<[1], [0], [0], [1], [0, 0, 1, 1], [], []>} : vector<8x16xf32>, vector<16x10xf32>, vector<8x10xf32> -> vector<8x10xf32>
    %c0_15 = arith.constant 0 : index
    %c0_16 = arith.constant 0 : index
    %17 = vector.load %arg7[%c0_15, %c0_16] : memref<1x10xf32, #tpu.memory_space<vmem>>, vector<1x10xf32>
    %18 = vector.broadcast %17 : vector<1x10xf32> to vector<8x10xf32>
    %19 = arith.addf %16, %18 : vector<8x10xf32>
    %c0_17 = arith.constant 0 : index
    %c0_18 = arith.constant 0 : index
    %20 = vector.load %arg8[%c0_17, %c0_18] : memref<8x10xf32, #tpu.memory_space<vmem>>, vector<8x10xf32>
    tpu.vector_store %arg8[%c0_17, %c0_18], %19 {strides = array<i32>} : memref<8x10xf32, #tpu.memory_space<vmem>>, vector<8x10xf32>,
    return
  }
  func.func @transform_0(%arg0: i32) -> (i32, i32) {
    %c0_i32 = arith.constant 0 : i32
    %c0_i32_0 = arith.constant 0 : i32
    return %arg0, %c0_i32 : i32, i32
  }
  func.func @transform_1(%arg0: i32) -> (i32, i32) {
    %c0_i32 = arith.constant 0 : i32
    %c0_i32_0 = arith.constant 0 : i32
    %c0_i32_1 = arith.constant 0 : i32
    return %c0_i32, %c0_i32_0 : i32, i32
  }
  func.func @transform_2(%arg0: i32) -> (i32, i32) {
    %c0_i32 = arith.constant 0 : i32
    %c0_i32_0 = arith.constant 0 : i32
    %c0_i32_1 = arith.constant 0 : i32
    return %c0_i32, %c0_i32_0 : i32, i32
  }
  func.func @transform_3(%arg0: i32) -> (i32, i32) {
    %c0_i32 = arith.constant 0 : i32
    %c0_i32_0 = arith.constant 0 : i32
    %c0_i32_1 = arith.constant 0 : i32
    return %c0_i32, %c0_i32_0 : i32, i32
  }
  func.func @transform_4(%arg0: i32) -> (i32, i32) {
    %c0_i32 = arith.constant 0 : i32
    %c0_i32_0 = arith.constant 0 : i32
    %c0_i32_1 = arith.constant 0 : i32
    return %c0_i32, %c0_i32_0 : i32, i32
  }
  func.func @transform_5(%arg0: i32) -> (i32, i32) {
    %c0_i32 = arith.constant 0 : i32
    %c0_i32_0 = arith.constant 0 : i32
    %c0_i32_1 = arith.constant 0 : i32
    return %c0_i32, %c0_i32_0 : i32, i32
  }
  func.func @transform_6(%arg0: i32) -> (i32, i32) {
    %c0_i32 = arith.constant 0 : i32
    %c0_i32_0 = arith.constant 0 : i32
    %c0_i32_1 = arith.constant 0 : i32
    return %c0_i32, %c0_i32_0 : i32, i32
  }
  func.func @transform_7(%arg0: i32) -> (i32, i32) {
    %c0_i32 = arith.constant 0 : i32
    %c0_i32_0 = arith.constant 0 : i32
    return %arg0, %c0_i32 : i32, i32
  }
}

</mosaic_0001>

<llo_original>
// kernel: tpu_custom_call.1
$region0: #{tpu_custom_call.1}
  #allocation0 [shape = 'u32[]', space=smem, size = 0x4, offset = 0x4, fixed_abs, tag = 'smem constant byte address 0x4 - core index']
  #allocation1 [shape = 'u32[144,128]{1,0:T(1,128)}', space=vmem, size = 0x12000, scoped, tag = 'internal scratch']
  %s0 = inlined_call_operand.vmem [shape: f32[8,4], index: 0, kind: input, shape index: {}]
  %s1 = inlined_call_operand.vmem [shape: f32[4,8], index: 1, kind: input, shape index: {}]
  %s2 = inlined_call_operand.vmem [shape: f32[1,8], index: 2, kind: input, shape index: {}]
  %s3 = inlined_call_operand.vmem [shape: f32[8,16], index: 3, kind: input, shape index: {}]
  %s4 = inlined_call_operand.vmem [shape: f32[1,16], index: 4, kind: input, shape index: {}]
  %s5 = inlined_call_operand.vmem [shape: f32[16,10], index: 5, kind: input, shape index: {}]
  %s6 = inlined_call_operand.vmem [shape: f32[1,10], index: 6, kind: input, shape index: {}]
  %s7 = inlined_call_operand.hbm [shape: f32[8,10], index: 7, kind: output, shape index: {}]
  %s8 = sld [smem:[#allocation0]]
  $region38: #{tpu_custom_call.1} parent=0
    _
  %s10 = ssub.s32 1, %s8
  %s11 = scalar_select 0, %s10, %s8
  $region1: #{tpu_custom_call.1} parent=0
    #allocation2 [shape = 'u8[4096]{0}', space=vmem, size = 0x1000, scoped, tag = 'output window, operand 0, single buffered']
    #allocation3 [shape = 's32[1]{0}', space=sflag, size = 0x4, scoped, tag = 'scoped memory for tpu_custom_call.1']
    %12 = vsyncpa [#allocation3], 0
    // Predicated region
    $region2: #{tpu_custom_call.1} parent=1 // pred_check
      _
    $region3: #{tpu_custom_call.1} parent=1 // pred_check_branch
      %14 = sbr.rel (0) target = $region5
    $region4: #{tpu_custom_call.1} parent=1 // pred_region
      _
    $region5: #{tpu_custom_call.1} parent=1 // pred_fallthru
      _
    // Predicated region
    $region6: #{tpu_custom_call.1} parent=1 // pred_check
      _
    $region7: #{tpu_custom_call.1} parent=1 // pred_check_branch
      %16 = sbr.rel (0) target = $region9
    $region8: #{tpu_custom_call.1} parent=1 // pred_region
      _
    $region9: #{tpu_custom_call.1} parent=1 // pred_fallthru
      _
    // Predicated region
    $region10: #{tpu_custom_call.1} parent=1 // pred_check
      _
    $region11: #{tpu_custom_call.1} parent=1 // pred_check_branch
      %18 = sbr.rel (0) target = $region13
    $region12: #{tpu_custom_call.1} parent=1 // pred_region
      _
    $region13: #{tpu_custom_call.1} parent=1 // pred_fallthru
      _
    // Predicated region
    $region14: #{tpu_custom_call.1} parent=1 // pred_check
      _
    $region15: #{tpu_custom_call.1} parent=1 // pred_check_branch
      %20 = sbr.rel (0) target = $region17
    $region16: #{tpu_custom_call.1} parent=1 // pred_region
      _
    $region17: #{tpu_custom_call.1} parent=1 // pred_fallthru
      _
    // Predicated region
    $region18: #{tpu_custom_call.1} parent=1 // pred_check
      _
    $region19: #{tpu_custom_call.1} parent=1 // pred_check_branch
      %22 = sbr.rel (0) target = $region21
    $region20: #{tpu_custom_call.1} parent=1 // pred_region
      _
    $region21: #{tpu_custom_call.1} parent=1 // pred_fallthru
      _
    // Predicated region
    $region22: #{tpu_custom_call.1} parent=1 // pred_check
      _
    $region23: #{tpu_custom_call.1} parent=1 // pred_check_branch
      %24 = sbr.rel (0) target = $region25
    $region24: #{tpu_custom_call.1} parent=1 // pred_region
      _
    $region25: #{tpu_custom_call.1} parent=1 // pred_fallthru
      _
    // Predicated region
    $region26: #{tpu_custom_call.1} parent=1 // pred_check
      _
    $region27: #{tpu_custom_call.1} parent=1 // pred_check_branch
      %26 = sbr.rel (0) target = $region29
    $region28: #{tpu_custom_call.1} parent=1 // pred_region
      _
    $region29: #{tpu_custom_call.1} parent=1 // pred_fallthru
      _
    %v27 = vld [vmem:[%s0] sm:$0xff]
    %v28 = vld [vmem:[%s1] sm:$0xf]
    %v29 = vld [vmem:[%s2] sm:$0x1]
    %v31 = vlaneseq
    %v32 = vshrl.u32 %v31, 7
    %v33 = vsub.s32 0, %v32
    %v34 = vrot.slane %v29, %v33
    %vm36 = vcmask 31744
    %v38 = vsel %vm36, %v27, 0
    %vm40 = vcmask 1043456
    %v42 = vsel %vm40, %v28, 0
    %44 = vmatprep.subr.mxu0 0.0
    %45 = vmatpush1.msra.mxu0 %v42
    %46 = vmatprep.subr.mxu0 0.0
    %47 = vmatpush1.msra.mxu0 0.0
    %48 = vmatprep.subr.mxu0 0.0
    %49 = vmatpush1.msra.mxu0 0.0
    %50 = vmatprep.subr.mxu0 0.0
    %51 = vmatpush1.msra.mxu0 0.0
    %52 = vmatprep.subr.mxu0 0.0
    %53 = vmatpush1.msra.mxu0 0.0
    %54 = vmatprep.subr.mxu0 0.0
    %55 = vmatpush1.msra.mxu0 0.0
    %56 = vmatprep.subr.mxu0 0.0
    %57 = vmatpush1.msra.mxu0 0.0
    %58 = vmatprep.subr.mxu0 0.0
    %59 = vmatpush1.msra.mxu0 0.0
    %60 = vmatprep.subr.mxu0 0.0
    %61 = vmatpush1.msra.mxu0 0.0
    %62 = vmatprep.subr.mxu0 0.0
    %63 = vmatpush1.msra.mxu0 0.0
    %64 = vmatprep.subr.mxu0 0.0
    %65 = vmatpush1.msra.mxu0 0.0
    %66 = vmatprep.subr.mxu0 0.0
    %67 = vmatpush1.msra.mxu0 0.0
    %68 = vmatprep.subr.mxu0 0.0
    %69 = vmatpush1.msra.mxu0 0.0
    %70 = vmatprep.subr.mxu0 0.0
    %71 = vmatpush1.msra.mxu0 0.0
    %72 = vmatprep.subr.mxu0 0.0
    %73 = vmatpush1.msra.mxu0 0.0
    %74 = vmatprep.subr.mxu0 0.0
    %75 = vmatpush1.msra.mxu0 0.0
    %76 = vmatprep.subr.mxu0 0.0
    %77 = vmatpush1.msra.mxu0 0.0
    %78 = vmatprep.subr.mxu0 0.0
    %79 = vmatpush1.msra.mxu0 0.0
    %80 = vmatprep.subr.mxu0 0.0
    %81 = vmatpush1.msra.mxu0 0.0
    %82 = vmatprep.subr.mxu0 0.0
    %83 = vmatpush1.msra.mxu0 0.0
    %84 = vmatprep.subr.mxu0 0.0
    %85 = vmatpush1.msra.mxu0 0.0
    %86 = vmatprep.subr.mxu0 0.0
    %87 = vmatpush1.msra.mxu0 0.0
    %88 = vmatprep.subr.mxu0 0.0
    %89 = vmatpush1.msra.mxu0 0.0
    %90 = vmatprep.subr.mxu0 0.0
    %91 = vmatpush1.msra.mxu0 0.0
    %92 = vmatprep.subr.mxu0 0.0
    %93 = vmatpush1.msra.mxu0 0.0
    %94 = vmatprep.subr.mxu0 0.0
    %95 = vmatpush1.msra.mxu0 0.0
    %96 = vmatprep.subr.mxu0 0.0
    %97 = vmatpush1.msra.mxu0 0.0
    %98 = vmatprep.subr.mxu0 0.0
    %99 = vmatpush1.msra.mxu0 0.0
    %100 = vmatprep.subr.mxu0 0.0
    %101 = vmatpush1.msra.mxu0 0.0
    %102 = vmatprep.subr.mxu0 0.0
    %103 = vmatpush1.msra.mxu0 0.0
    %104 = vmatprep.subr.mxu0 0.0
    %105 = vmatpush1.msra.mxu0 0.0
    %106 = vmatprep.subr.mxu0 0.0
    %107 = vmatpush1.msra.mxu0 0.0
    %108 = vmatprep.mubr.f32.mxu0 0.0
    %109 = vmatmul.mubr.f32.gmra.mrb[0].mxu0 %v38
    %v110 = vpop.f32.mrb[0].mxu0
    %v111 = vadd.f32 %v34, %v110
    %v112 = vpop.f32.mrb[0].mxu0
    %113 = vdwg.mxu0
    %v114 = vmax.f32 %v111, 0.0
    %v115 = vld [vmem:[%s3] sm:$0xff]
    %v116 = vld [vmem:[%s4] sm:$0x1]
    %v118 = vlaneseq
    %v119 = vshrl.u32 %v118, 7
    %v120 = vsub.s32 0, %v119
    %v121 = vrot.slane %v116, %v120
    %vm123 = vcmask 64512
    %v125 = vsel %vm123, %v114, 0
    %127 = vmatprep.subr.mxu0 0.0
    %128 = vmatpush1.msra.mxu0 %v115
    %129 = vmatprep.subr.mxu0 0.0
    %130 = vmatpush1.msra.mxu0 0.0
    %131 = vmatprep.subr.mxu0 0.0
    %132 = vmatpush1.msra.mxu0 0.0
    %133 = vmatprep.subr.mxu0 0.0
    %134 = vmatpush1.msra.mxu0 0.0
    %135 = vmatprep.subr.mxu0 0.0
    %136 = vmatpush1.msra.mxu0 0.0
    %137 = vmatprep.subr.mxu0 0.0
    %138 = vmatpush1.msra.mxu0 0.0
    %139 = vmatprep.subr.mxu0 0.0
    %140 = vmatpush1.msra.mxu0 0.0
    %141 = vmatprep.subr.mxu0 0.0
    %142 = vmatpush1.msra.mxu0 0.0
    %143 = vmatprep.subr.mxu0 0.0
    %144 = vmatpush1.msra.mxu0 0.0
    %145 = vmatprep.subr.mxu0 0.0
    %146 = vmatpush1.msra.mxu0 0.0
    %147 = vmatprep.subr.mxu0 0.0
    %148 = vmatpush1.msra.mxu0 0.0
    %149 = vmatprep.subr.mxu0 0.0
    %150 = vmatpush1.msra.mxu0 0.0
    %151 = vmatprep.subr.mxu0 0.0
    %152 = vmatpush1.msra.mxu0 0.0
    %153 = vmatprep.subr.mxu0 0.0
    %154 = vmatpush1.msra.mxu0 0.0
    %155 = vmatprep.subr.mxu0 0.0
    %156 = vmatpush1.msra.mxu0 0.0
    %157 = vmatprep.subr.mxu0 0.0
    %158 = vmatpush1.msra.mxu0 0.0
    %159 = vmatprep.subr.mxu0 0.0
    %160 = vmatpush1.msra.mxu0 0.0
    %161 = vmatprep.subr.mxu0 0.0
    %162 = vmatpush1.msra.mxu0 0.0
    %163 = vmatprep.subr.mxu0 0.0
    %164 = vmatpush1.msra.mxu0 0.0
    %165 = vmatprep.subr.mxu0 0.0
    %166 = vmatpush1.msra.mxu0 0.0
    %167 = vmatprep.subr.mxu0 0.0
    %168 = vmatpush1.msra.mxu0 0.0
    %169 = vmatprep.subr.mxu0 0.0
    %170 = vmatpush1.msra.mxu0 0.0
    %171 = vmatprep.subr.mxu0 0.0
    %172 = vmatpush1.msra.mxu0 0.0
    %173 = vmatprep.subr.mxu0 0.0
    %174 = vmatpush1.msra.mxu0 0.0
    %175 = vmatprep.subr.mxu0 0.0
    %176 = vmatpush1.msra.mxu0 0.0
    %177 = vmatprep.subr.mxu0 0.0
    %178 = vmatpush1.msra.mxu0 0.0
    %179 = vmatprep.subr.mxu0 0.0
    %180 = vmatpush1.msra.mxu0 0.0
    %181 = vmatprep.subr.mxu0 0.0
    %182 = vmatpush1.msra.mxu0 0.0
    %183 = vmatprep.subr.mxu0 0.0
    %184 = vmatpush1.msra.mxu0 0.0
    %185 = vmatprep.subr.mxu0 0.0
    %186 = vmatpush1.msra.mxu0 0.0
    %187 = vmatprep.subr.mxu0 0.0
    %188 = vmatpush1.msra.mxu0 0.0
    %189 = vmatprep.subr.mxu0 0.0
    %190 = vmatpush1.msra.mxu0 0.0
    %191 = vmatprep.mubr.f32.mxu0 0.0
    %192 = vmatmul.mubr.f32.gmra.mrb[0].mxu0 %v125
    %v193 = vpop.f32.mrb[0].mxu0
    %v194 = vadd.f32 %v121, %v193
    %v195 = vpop.f32.mrb[0].mxu0
    %196 = vdwg.mxu0
    %v197 = vmax.f32 %v194, 0.0
    %v198 = vld [vmem:[%s5] sm:$0xff]
    %v199 = vld [vmem:[%s5 + $0x8] sm:$0xff]
    %v200 = vld [vmem:[%s6] sm:$0x1]
    %v202 = vlaneseq
    %v203 = vshrl.u32 %v202, 7
    %v204 = vsub.s32 0, %v203
    %v205 = vrot.slane %v200, %v204
    %vm207 = vcmask 130048
    %v209 = vsel %vm207, %v197, 0
    %211 = vmatprep.subr.mxu0 0.0
    %212 = vmatpush1.msra.mxu0 %v198
    %213 = vmatprep.subr.mxu0 0.0
    %214 = vmatpush1.msra.mxu0 %v199
    %215 = vmatprep.subr.mxu0 0.0
    %216 = vmatpush1.msra.mxu0 0.0
    %217 = vmatprep.subr.mxu0 0.0
    %218 = vmatpush1.msra.mxu0 0.0
    %219 = vmatprep.subr.mxu0 0.0
    %220 = vmatpush1.msra.mxu0 0.0
    %221 = vmatprep.subr.mxu0 0.0
    %222 = vmatpush1.msra.mxu0 0.0
    %223 = vmatprep.subr.mxu0 0.0
    %224 = vmatpush1.msra.mxu0 0.0
    %225 = vmatprep.subr.mxu0 0.0
    %226 = vmatpush1.msra.mxu0 0.0
    %227 = vmatprep.subr.mxu0 0.0
    %228 = vmatpush1.msra.mxu0 0.0
    %229 = vmatprep.subr.mxu0 0.0
    %230 = vmatpush1.msra.mxu0 0.0
    %231 = vmatprep.subr.mxu0 0.0
    %232 = vmatpush1.msra.mxu0 0.0
    %233 = vmatprep.subr.mxu0 0.0
    %234 = vmatpush1.msra.mxu0 0.0
    %235 = vmatprep.subr.mxu0 0.0
    %236 = vmatpush1.msra.mxu0 0.0
    %237 = vmatprep.subr.mxu0 0.0
    %238 = vmatpush1.msra.mxu0 0.0
    %239 = vmatprep.subr.mxu0 0.0
    %240 = vmatpush1.msra.mxu0 0.0
    %241 = vmatprep.subr.mxu0 0.0
    %242 = vmatpush1.msra.mxu0 0.0
    %243 = vmatprep.subr.mxu0 0.0
    %244 = vmatpush1.msra.mxu0 0.0
    %245 = vmatprep.subr.mxu0 0.0
    %246 = vmatpush1.msra.mxu0 0.0
    %247 = vmatprep.subr.mxu0 0.0
    %248 = vmatpush1.msra.mxu0 0.0
    %249 = vmatprep.subr.mxu0 0.0
    %250 = vmatpush1.msra.mxu0 0.0
    %251 = vmatprep.subr.mxu0 0.0
    %252 = vmatpush1.msra.mxu0 0.0
    %253 = vmatprep.subr.mxu0 0.0
    %254 = vmatpush1.msra.mxu0 0.0
    %255 = vmatprep.subr.mxu0 0.0
    %256 = vmatpush1.msra.mxu0 0.0
    %257 = vmatprep.subr.mxu0 0.0
    %258 = vmatpush1.msra.mxu0 0.0
    %259 = vmatprep.subr.mxu0 0.0
    %260 = vmatpush1.msra.mxu0 0.0
    %261 = vmatprep.subr.mxu0 0.0
    %262 = vmatpush1.msra.mxu0 0.0
    %263 = vmatprep.subr.mxu0 0.0
    %264 = vmatpush1.msra.mxu0 0.0
    %265 = vmatprep.subr.mxu0 0.0
    %266 = vmatpush1.msra.mxu0 0.0
    %267 = vmatprep.subr.mxu0 0.0
    %268 = vmatpush1.msra.mxu0 0.0
    %269 = vmatprep.subr.mxu0 0.0
    %270 = vmatpush1.msra.mxu0 0.0
    %271 = vmatprep.subr.mxu0 0.0
    %272 = vmatpush1.msra.mxu0 0.0
    %273 = vmatprep.subr.mxu0 0.0
    %274 = vmatpush1.msra.mxu0 0.0
    %275 = vmatprep.mubr.f32.mxu0 0.0
    %276 = vmatmul.mubr.f32.gmra.mrb[0].mxu0 %v209
    %v277 = vpop.f32.mrb[0].mxu0
    %v278 = vadd.f32 %v205, %v277
    %v279 = vpop.f32.mrb[0].mxu0
    %280 = vdwg.mxu0
    %vm281 = vcmask 80896
    %282 = vst.msk [vmem:[#allocation2] sm:$0xff] %vm281, %v278
    // Predicated region
    $region30: #{tpu_custom_call.1} parent=1 // pred_check
      _
    $region31: #{tpu_custom_call.1} parent=1 // pred_check_branch
      %284 = sbr.rel (0) target = $region33
    $region32: #{tpu_custom_call.1} parent=1 // pred_region
      %s286 = ssub.s32 128, 128
      %287 = vsyncadd [#allocation3], %s286
      %s289 = sshll.u32 [#allocation2], 4
      %s290 = int_to_ptr.vmem [resolvable:$true] %s289
      %292 = dma.vmem_to_hbm [thread:$0]  %s290, 128, %s7, [#allocation3]
    $region33: #{tpu_custom_call.1} parent=1 // pred_fallthru
      _
    // Predicated region
    $region34: #{tpu_custom_call.1} parent=1 // pred_check
      _
    $region35: #{tpu_custom_call.1} parent=1 // pred_check_branch
      %294 = sbr.rel (0) target = $region37
    $region36: #{tpu_custom_call.1} parent=1 // pred_region
      %295 = dma.done [#allocation3], 128
    $region37: #{tpu_custom_call.1} parent=1 // pred_fallthru
      _
    %296 = vsyncpa [#allocation3], 1

</llo_original>
